<compile_context>
chip_gen: v5e
topology: v5e:2x2
jax: 0.10.0
libtpu: 0.0.40
codegen_flags: <defaults>
</compile_context>

<pallas_src>
import jax
import jax.numpy as jnp
import numpy as np
from jax.experimental import pallas as pl
from jax.experimental.pallas import tpu as pltpu


# ---------------------------------------------------------------------------
# VMEM budgeting / tile derivation helpers
# ---------------------------------------------------------------------------
def _vmem_budget_bytes(frac=0.75):
    """Usable VMEM budget (bytes). Conservative fallback = v7x 64 MiB per TC."""
    cap = 64 * 1024 * 1024
    try:
        cap = int(pltpu.get_tpu_info().vmem_capacity_bytes)
    except Exception:
        pass
    return int(cap * frac)


def _largest_divisor_tile(n, max_tile, granule=8):
    """Largest t <= max_tile with n % t == 0 and (t % granule == 0 or t == n)."""
    if n <= max_tile:
        return n
    t = (min(n, max_tile) // granule) * granule
    while t >= granule:
        if n % t == 0:
            return t
        t -= granule
    return n  # no aligned divisor fits the budget; fall back to full extent


# ---------------------------------------------------------------------------
# Kernel 1: setup_memory — encoded_projected = encoded @ W_enc + b_enc
# (row-tiled over B*S, weights resident, bf16 MXU inputs, f32 accumulation)
# ---------------------------------------------------------------------------
def encoder_proj_kernel(x_ref, w_ref, b_ref, o_ref):
    o_ref[...] = (jnp.dot(x_ref[...], w_ref[...],
                          preferred_element_type=jnp.float32) + b_ref[...])


def setup_memory(encoded, w_enc, b_enc, *, tm=None):
    B, S, H = encoded.shape
    A = w_enc.shape[1]
    BS = B * S
    flat = encoded.reshape(BS, H)  # wrapper-side reshape (XLA layout plumbing)

    budget = _vmem_budget_bytes()
    resident = H * A * 2 + A * 4                       # w_enc bf16 + b_enc f32
    per_row = H * 2 + A * 4                            # bf16 in row + f32 out row
    if tm is None:
        max_rows = max((budget - resident) // (2 * per_row), 8)
        tm = _largest_divisor_tile(BS, max_rows)
    needed = resident + 2 * tm * per_row
    vmem_limit = min(budget, max(2 * needed, 16 * 1024 * 1024))

    out = pl.pallas_call(
        encoder_proj_kernel,
        out_shape=jax.ShapeDtypeStruct((BS, A), jnp.float32),
        grid_spec=pltpu.PrefetchScalarGridSpec(
            num_scalar_prefetch=0,
            grid=(pl.cdiv(BS, tm),),
            in_specs=[
                pl.BlockSpec((tm, H), lambda i: (i, 0)),   # encoded rows (bf16)
                pl.BlockSpec((H, A), lambda i: (0, 0)),    # w_enc, resident
                pl.BlockSpec((1, A), lambda i: (0, 0)),    # b_enc, resident
            ],
            out_specs=pl.BlockSpec((tm, A), lambda i: (i, 0)),
        ),
        compiler_params=pltpu.CompilerParams(
            dimension_semantics=("parallel",),
            vmem_limit_bytes=vmem_limit,
        ),
        cost_estimate=pl.CostEstimate(
            flops=2 * BS * H * A,
            transcendentals=0,
            bytes_accessed=BS * H * 2 + H * A * 2 + A * 4 + BS * A * 4,
        ),
    )(flat, w_enc, b_enc)
    return out.reshape(B, S, A)


# ---------------------------------------------------------------------------
# Kernel 2: forward — attention (online softmax over S-tiles, encoder
# projection recomputed in-kernel) + fused-gate GRUCell step.
# ---------------------------------------------------------------------------
def attention_gru_kernel(
    enc_ref, x_ref, h_ref,
    wenc_ref, benc_ref, wdec_ref, bdec_ref, wout_ref, bout_ref,
    wih_ref, whh_ref, bih_ref, bhh_ref,
    hnew_ref,
    pd_sc, m_sc, l_sc, acc_sc,
):
    si = pl.program_id(1)
    ns = pl.num_programs(1)
    H = hnew_ref.shape[-1]

    # ---- one-time init per batch block: decoder projection + softmax state --
    @pl.when(si == 0)
    def _init():
        h_bf = h_ref[...].astype(jnp.bfloat16)
        pd_sc[...] = (jnp.dot(h_bf, wdec_ref[...],
                              preferred_element_type=jnp.float32) + bdec_ref[...])
        m_sc[...] = jnp.full(m_sc.shape, -jnp.inf, jnp.float32)
        l_sc[...] = jnp.zeros(l_sc.shape, jnp.float32)
        acc_sc[...] = jnp.zeros(acc_sc.shape, jnp.float32)

    # ---- per-sequence-tile scores + online softmax accumulation ------------
    enc = enc_ref[...]                                         # [Bb, TS, H] bf16
    # Recompute the encoder projection on the otherwise-idle MXU instead of
    # streaming a precomputed f32 encoded_projected tensor from HBM.
    encp = (jnp.einsum("bth,ha->bta", enc, wenc_ref[...],
                       preferred_element_type=jnp.float32) + benc_ref[...])
    t = jnp.tanh(encp + pd_sc[...][:, None, :])                # [Bb, TS, A] f32
    # VPU multiply + XLU lane-reduce (EUP tanh is the binding slot here).
    scores = jnp.sum(t * wout_ref[...], axis=-1) + bout_ref[0, 0]   # [Bb, TS]

    m_prev = m_sc[...]                                         # [Bb, 1]
    m_new = jnp.maximum(m_prev, jnp.max(scores, axis=-1, keepdims=True))
    alpha = jnp.exp(m_prev - m_new)                            # [Bb, 1]
    p = jnp.exp(scores - m_new)                                # [Bb, TS] f32
    l_sc[...] = alpha * l_sc[...] + jnp.sum(p, axis=-1, keepdims=True)
    # Context partial sum on the MXU: [Bb,1,TS] @ [Bb,TS,H] -> [Bb,1,H]
    ctx = jnp.einsum("bqt,bth->bqh", p[:, None, :].astype(jnp.bfloat16), enc,
                     preferred_element_type=jnp.float32)[:, 0, :]
    acc_sc[...] = alpha * acc_sc[...] + ctx
    m_sc[...] = m_new

    # ---- finalize: normalize context and run the GRUCell (fused gates) -----
    @pl.when(si == ns - 1)
    def _finalize():
        attention = acc_sc[...] * pl.reciprocal(l_sc[...], approx=True)  # [Bb, H]
        x_bf = x_ref[...].astype(jnp.bfloat16)
        a_bf = attention.astype(jnp.bfloat16)
        h = h_ref[...]
        h_bf = h.astype(jnp.bfloat16)

        xa = jnp.concatenate([x_bf, a_bf], axis=-1)            # [Bb, E+H]
        gi = (jnp.dot(xa, wih_ref[...],
                      preferred_element_type=jnp.float32) + bih_ref[...])   # [Bb, 3H]
        gh = (jnp.dot(h_bf, whh_ref[...],
                      preferred_element_type=jnp.float32) + bhh_ref[...])   # [Bb, 3H]

        r = jax.nn.sigmoid(gi[:, 0:H] + gh[:, 0:H])
        z = jax.nn.sigmoid(gi[:, H:2 * H] + gh[:, H:2 * H])
        n = jnp.tanh(gi[:, 2 * H:3 * H] + r * gh[:, 2 * H:3 * H])
        hnew_ref[...] = (1.0 - z) * n + z * h


def with_attention_forward(encoded, inputs, states, params, *, ts=None):
    B, S, H = encoded.shape
    A = params["w_dec"].shape[1]
    E = inputs.shape[-1]
    H3 = 3 * H

    # Batch split so v7x's second TensorCore gets half the batch (no effect on
    # single-TC v5e/v6e beyond two cheap grid steps).  Blocks must be 8-row
    # aligned to satisfy the (8,128) sublane rule.
    nb = 2 if (B % 2 == 0 and (B // 2) % 8 == 0) else 1
    Bb = B // nb

    budget = _vmem_budget_bytes()
    resident = (2 * H * A * 2                 # w_enc + w_dec (bf16)
                + (E + H) * H3 * 2            # w_ih (bf16, fused)
                + H * H3 * 2                  # w_hh (bf16, fused)
                + (3 * A + 2 * H3 + 1) * 4    # f32 biases, w_out, b_out
                + Bb * (E + H) * 4            # resident inputs/states blocks
                + Bb * H * 4)                 # resident output block
    scratch_bytes = Bb * (A + H + 2) * 4
    if ts is None:
        avail = max(budget - resident - scratch_bytes, 0)
        max_rows = max(avail // (2 * Bb * H * 2), 8)   # double-buffered bf16 enc tiles
        ts = _largest_divisor_tile(S, max_rows)
    # TODO(synk): mask the ragged final sequence tile instead of requiring divisibility.
    assert S % ts == 0, "sequence length must be divisible by the sequence tile"
    ns = S // ts

    needed = resident + scratch_bytes + 2 * Bb * ts * H * 2
    vmem_limit = min(budget, max(2 * needed, 16 * 1024 * 1024))

    grid_spec = pltpu.PrefetchScalarGridSpec(
        num_scalar_prefetch=0,
        grid=(nb, ns),
        in_specs=[
            pl.BlockSpec((Bb, ts, H), lambda b, s: (b, s, 0)),   # encoded (bf16)
            pl.BlockSpec((Bb, E), lambda b, s: (b, 0)),          # inputs
            pl.BlockSpec((Bb, H), lambda b, s: (b, 0)),          # states
            pl.BlockSpec((H, A), lambda b, s: (0, 0)),           # w_enc (bf16)
            pl.BlockSpec((1, A), lambda b, s: (0, 0)),           # b_enc (f32)
            pl.BlockSpec((H, A), lambda b, s: (0, 0)),           # w_dec (bf16)
            pl.BlockSpec((1, A), lambda b, s: (0, 0)),           # b_dec (f32)
            pl.BlockSpec((1, A), lambda b, s: (0, 0)),           # w_out (f32)
            pl.BlockSpec(memory_space=pltpu.MemorySpace.SMEM),   # b_out scalar
            pl.BlockSpec((E + H, H3), lambda b, s: (0, 0)),      # w_ih fused (bf16)
            pl.BlockSpec((H, H3), lambda b, s: (0, 0)),          # w_hh fused (bf16)
            pl.BlockSpec((1, H3), lambda b, s: (0, 0)),          # b_ih (f32)
            pl.BlockSpec((1, H3), lambda b, s: (0, 0)),          # b_hh (f32)
        ],
        out_specs=pl.BlockSpec((Bb, H), lambda b, s: (b, 0)),    # accumulator-style output
        scratch_shapes=[
            pltpu.VMEM((Bb, A), jnp.float32),   # projected decoder state
            pltpu.VMEM((Bb, 1), jnp.float32),   # running max
            pltpu.VMEM((Bb, 1), jnp.float32),   # running denominator
            pltpu.VMEM((Bb, H), jnp.float32),   # running (unnormalized) context
        ],
    )

    flops = (2 * B * H * A + 2 * B * S * H * A + B * S * A + 2 * B * S * H
             + 2 * B * (E + H) * H3 + 2 * B * H * H3)
    transcendentals = B * S * A + 2 * B * S + 3 * B * H + B
    bytes_accessed = (B * S * H * 2 + B * (E + 2 * H) * 4
                      + 2 * H * A * 2 + (3 * A + 2 * H3 + 1) * 4
                      + (E + 2 * H) * H3 * 2 + B * H * 4)

    # TODO(synk): for real autoregressive decoding, fuse all time steps into one
    # pallas_call (extra "arbitrary" grid axis over steps, weights + hidden state
    # resident in VMEM, input_output_aliases for the state) instead of one call
    # per decode step, which re-streams every weight from HBM.
    return pl.pallas_call(
        attention_gru_kernel,
        out_shape=jax.ShapeDtypeStruct((B, H), jnp.float32),
        grid_spec=grid_spec,
        compiler_params=pltpu.CompilerParams(
            dimension_semantics=("parallel", "arbitrary"),
            vmem_limit_bytes=vmem_limit,
        ),
        cost_estimate=pl.CostEstimate(
            flops=flops, transcendentals=transcendentals,
            bytes_accessed=bytes_accessed),
    )(
        encoded, inputs, states,
        params["w_enc"], params["b_enc"], params["w_dec"], params["b_dec"],
        params["w_out"], params["b_out"],
        params["w_ih"], params["w_hh"], params["b_ih"], params["b_hh"],
    )


# ---------------------------------------------------------------------------
# Pure-JAX reference (mirrors the PyTorch forward; same bf16 cast points as the
# kernels so the comparison tolerance stays tight)
# ---------------------------------------------------------------------------
def reference_forward(encoded, inputs, states, params):
    f32, bf16 = jnp.float32, jnp.bfloat16
    H = states.shape[-1]
    encp = (jnp.einsum("bsh,ha->bsa", encoded, params["w_enc"],
                       preferred_element_type=f32) + params["b_enc"])
    h_bf = states.astype(bf16)
    pd = jnp.dot(h_bf, params["w_dec"], preferred_element_type=f32) + params["b_dec"]
    t = jnp.tanh(encp + pd[:, None, :])
    scores = jnp.sum(t * params["w_out"], axis=-1) + params["b_out"][0, 0]
    attn_w = jax.nn.softmax(scores, axis=1)
    attention = jnp.einsum("bs,bsh->bh", attn_w.astype(bf16), encoded,
                           preferred_element_type=f32)
    xa = jnp.concatenate([inputs.astype(bf16), attention.astype(bf16)], axis=-1)
    gi = jnp.dot(xa, params["w_ih"], preferred_element_type=f32) + params["b_ih"]
    gh = jnp.dot(h_bf, params["w_hh"], preferred_element_type=f32) + params["b_hh"]
    r = jax.nn.sigmoid(gi[:, 0:H] + gh[:, 0:H])
    z = jax.nn.sigmoid(gi[:, H:2 * H] + gh[:, H:2 * H])
    n = jnp.tanh(gi[:, 2 * H:] + r * gh[:, 2 * H:])
    h_new = (1.0 - z) * n + z * states
    return encp, h_new


# ---------------------------------------------------------------------------
# Deterministic parameter init (same shapes/roles as the torch module __init__;
# GRU weights stored fused: W_ih [E+H, 3H], W_hh [H, 3H], gate order r, z, n)
# ---------------------------------------------------------------------------
def init_params(key, hidden, attn_dim, embed):
    ks = jax.random.split(key, 10)

    def uni(k, shape, fan_in, dtype=jnp.float32):
        bound = 1.0 / np.sqrt(fan_in)
        return jax.random.uniform(k, shape, jnp.float32, -bound, bound).astype(dtype)

    in_size = embed + hidden  # GRUCell input = cat([inputs, attention])
    bf16 = jnp.bfloat16
    return {
        # _project_encoder_layer: Linear(hidden -> attn_dim), stored [H, A]
        "w_enc": uni(ks[0], (hidden, attn_dim), hidden, bf16),
        "b_enc": uni(ks[1], (1, attn_dim), hidden),
        # _project_decoder_layer: Linear(hidden -> attn_dim)
        "w_dec": uni(ks[2], (hidden, attn_dim), hidden, bf16),
        "b_dec": uni(ks[3], (1, attn_dim), hidden),
        # _output_layer: Linear(attn_dim -> 1), stored as [1, A] row + (1,1) bias
        "w_out": uni(ks[4], (1, attn_dim), attn_dim),
        "b_out": uni(ks[5], (1, 1), attn_dim),
        # GRUCell weights, fused across gates: [in_features, 3H] / [H, 3H]
        "w_ih": uni(ks[6], (in_size, 3 * hidden), in_size, bf16),
        "w_hh": uni(ks[7], (hidden, 3 * hidden), hidden, bf16),
        "b_ih": uni(ks[8], (1, 3 * hidden), in_size),
        "b_hh": uni(ks[9], (1, 3 * hidden), hidden),
    }


if __name__ == "__main__":
    # Small but lane-dense shapes: batch=16 (two 8-row batch blocks for the
    # second v7x TensorCore), src seq=64, hidden=attn=embed=128.
    B, S, H, A, E = 16, 64, 128, 128, 128

    key = jax.random.PRNGKey(0)
    k_enc, k_x, k_h, k_p = jax.random.split(key, 4)
    encoded = jax.random.normal(k_enc, (B, S, H), jnp.float32).astype(jnp.bfloat16)
    inputs = jax.random.normal(k_x, (B, E), jnp.float32)
    states = jax.random.normal(k_h, (B, H), jnp.float32)
    params = init_params(k_p, H, A, E)

    # Kernel 1: setup_memory (row-tiled encoder projection; module API).
    encoded_projected = setup_memory(encoded, params["w_enc"], params["b_enc"])

    # Kernel 2: fused attention + GRU step.  Default tiles derive ts = S
    # (single sequence step per batch block) from the VMEM budget.
    h_new = with_attention_forward(encoded, inputs, states, params)
    h_new = jax.block_until_ready(h_new)

    # Also exercise the multi-tile online-softmax path explicitly (ts=16 -> 4
    # sequence tiles per batch block).
    h_new_tiled = with_attention_forward(encoded, inputs, states, params, ts=16)
    h_new_tiled = jax.block_until_ready(h_new_tiled)

    encp_ref, h_ref = reference_forward(encoded, inputs, states, params)
    np.testing.assert_allclose(np.asarray(encoded_projected), np.asarray(encp_ref),
                               rtol=1e-3, atol=1e-3)
    np.testing.assert_allclose(np.asarray(h_new), np.asarray(h_ref),
                               rtol=2e-2, atol=2e-2)
    np.testing.assert_allclose(np.asarray(h_new_tiled), np.asarray(h_ref),
                               rtol=2e-2, atol=2e-2)
    print("KERNEL_OK")
</pallas_src>

<mosaic_0001>
module attributes {stable_mosaic.version = 11 : i64} {
  func.func @encoder_proj_kernel(%arg0: i32, %arg1: memref<1024x128xbf16, #tpu.memory_space<vmem>>, %arg2: memref<128x128xbf16, #tpu.memory_space<vmem>>, %arg3: memref<1x128xf32, #tpu.memory_space<vmem>>, %arg4: memref<1024x128xf32, #tpu.memory_space<vmem>>) attributes {dimension_semantics = [#tpu.dimension_semantics<parallel>], iteration_bounds = array<i64: 1>, scalar_prefetch = 0 : i64, scratch_operands = 0 : i64, tpu.core_type = #tpu.core_type<tc>, window_params = [{transform_indices = @transform_0, window_bounds = array<i64: 1024, 128>}, {pipeline_mode = #tpu.pipeline_mode<synchronous>, transform_indices = @transform_1, window_bounds = array<i64: 128, 128>}, {pipeline_mode = #tpu.pipeline_mode<synchronous>, transform_indices = @transform_2, window_bounds = array<i64: 1, 128>}, {transform_indices = @transform_3, window_bounds = array<i64: 1024, 128>}]} {
    %c0 = arith.constant 0 : index
    %c0_0 = arith.constant 0 : index
    %0 = vector.load %arg1[%c0, %c0_0] : memref<1024x128xbf16, #tpu.memory_space<vmem>>, vector<1024x128xbf16>
    %c0_1 = arith.constant 0 : index
    %c0_2 = arith.constant 0 : index
    %1 = vector.load %arg2[%c0_1, %c0_2] : memref<128x128xbf16, #tpu.memory_space<vmem>>, vector<128x128xbf16>
    %cst = arith.constant dense<0.000000e+00> : vector<1024x128xf32>
    %2 = tpu.matmul %0, %1, %cst {dimension_numbers = #tpu.dot_dimension_numbers<[1], [0], [0], [1], [0, 0, 1, 1], [], []>} : vector<1024x128xbf16>, vector<128x128xbf16>, vector<1024x128xf32> -> vector<1024x128xf32>
    %c0_3 = arith.constant 0 : index
    %c0_4 = arith.constant 0 : index
    %3 = vector.load %arg3[%c0_3, %c0_4] : memref<1x128xf32, #tpu.memory_space<vmem>>, vector<1x128xf32>
    %4 = vector.broadcast %3 : vector<1x128xf32> to vector<1024x128xf32>
    %5 = arith.addf %2, %4 : vector<1024x128xf32>
    %c0_5 = arith.constant 0 : index
    %c0_6 = arith.constant 0 : index
    %6 = vector.load %arg4[%c0_5, %c0_6] : memref<1024x128xf32, #tpu.memory_space<vmem>>, vector<1024x128xf32>
    tpu.vector_store %arg4[%c0_5, %c0_6], %5 {strides = array<i32>} : memref<1024x128xf32, #tpu.memory_space<vmem>>, vector<1024x128xf32>,
    return
  }
  func.func @transform_0(%arg0: i32) -> (i32, i32) {
    %c0_i32 = arith.constant 0 : i32
    %c0_i32_0 = arith.constant 0 : i32
    return %arg0, %c0_i32 : i32, i32
  }
  func.func @transform_1(%arg0: i32) -> (i32, i32) {
    %c0_i32 = arith.constant 0 : i32
    %c0_i32_0 = arith.constant 0 : i32
    %c0_i32_1 = arith.constant 0 : i32
    return %c0_i32, %c0_i32_0 : i32, i32
  }
  func.func @transform_2(%arg0: i32) -> (i32, i32) {
    %c0_i32 = arith.constant 0 : i32
    %c0_i32_0 = arith.constant 0 : i32
    %c0_i32_1 = arith.constant 0 : i32
    return %c0_i32, %c0_i32_0 : i32, i32
  }
  func.func @transform_3(%arg0: i32) -> (i32, i32) {
    %c0_i32 = arith.constant 0 : i32
    %c0_i32_0 = arith.constant 0 : i32
    return %arg0, %c0_i32 : i32, i32
  }
}

</mosaic_0001>

<llo_original>
// kernel: tpu_custom_call.1
$region0: #{tpu_custom_call.1}
  #allocation0 [shape = 'u32[]', space=smem, size = 0x4, offset = 0x4, fixed_abs, tag = 'smem constant byte address 0x4 - core index']
  #allocation1 [shape = 'u32[72,128]{1,0:T(1,128)}', space=vmem, size = 0x9000, scoped, tag = 'internal scratch']
  %s0 = inlined_call_operand.hbm [shape: bf16[1024,128], index: 0, kind: input, shape index: {}]
  %s1 = inlined_call_operand.hbm [shape: bf16[128,128], index: 1, kind: input, shape index: {}]
  %s2 = inlined_call_operand.vmem [shape: f32[1,128], index: 2, kind: input, shape index: {}]
  %s3 = inlined_call_operand.hbm [shape: f32[1024,128], index: 3, kind: output, shape index: {}]
  %s4 = sld [smem:[#allocation0]]
  $region30: #{tpu_custom_call.1} parent=0
    _
  %s6 = ssub.s32 1, %s4
  %s7 = scalar_select 0, %s6, %s4
  $region1: #{tpu_custom_call.1} parent=0
    #allocation2 [shape = 'u8[262144]{0}', space=vmem, size = 0x40000, scoped, tag = 'input window, operand 0, single buffered']
    #allocation3 [shape = 's32[1]{0}', space=sflag, size = 0x4, scoped, tag = 'scoped memory for tpu_custom_call.1']
    #allocation4 [shape = 's32[1]{0}', space=sflag, size = 0x4, scoped, tag = 'scoped memory for tpu_custom_call.1']
    #allocation5 [shape = 'u8[32768]{0}', space=vmem, size = 0x8000, scoped, tag = 'input window, operand 1, single buffered']
    #allocation6 [shape = 's32[1]{0}', space=sflag, size = 0x4, scoped, tag = 'scoped memory for tpu_custom_call.1']
    #allocation7 [shape = 'u8[524288]{0}', space=vmem, size = 0x80000, scoped, tag = 'output window, operand 0, single buffered']
    %8 = vsyncpa [#allocation3], 0
    %9 = vsyncpa [#allocation6], 0
    %10 = vsyncpa [#allocation4], 0
    // Predicated region
    $region2: #{tpu_custom_call.1} parent=1 // pred_check
      _
    $region3: #{tpu_custom_call.1} parent=1 // pred_check_branch
      %12 = sbr.rel (0) target = $region5
    $region4: #{tpu_custom_call.1} parent=1 // pred_region
      %14 = vsyncadd [#allocation3], 0
      %s15 = sshll.u32 %s0, 4
      %s16 = int_to_ptr.hbm [resolvable:$true] %s15
      %s17 = sshll.u32 [#allocation2], 4
      %s18 = int_to_ptr.vmem [resolvable:$true] %s17
      %23 = dma.hbm_to_vmem [thread:$0]  %s16, 8192, %s18, [#allocation3], 64, 64, 4
    $region5: #{tpu_custom_call.1} parent=1 // pred_fallthru
      _
    // Predicated region
    $region6: #{tpu_custom_call.1} parent=1 // pred_check
      _
    $region7: #{tpu_custom_call.1} parent=1 // pred_check_branch
      %25 = sbr.rel (0) target = $region9
    $region8: #{tpu_custom_call.1} parent=1 // pred_region
      %27 = vsyncadd [#allocation6], 0
      %s28 = sshll.u32 %s1, 4
      %s29 = int_to_ptr.hbm [resolvable:$true] %s28
      %s30 = sshll.u32 [#allocation5], 4
      %s31 = int_to_ptr.vmem [resolvable:$true] %s30
      %36 = dma.hbm_to_vmem [thread:$0]  %s29, 1024, %s31, [#allocation6], 64, 64, 4
    $region9: #{tpu_custom_call.1} parent=1 // pred_fallthru
      _
    // Predicated region
    $region10: #{tpu_custom_call.1} parent=1 // pred_check
      _
    $region11: #{tpu_custom_call.1} parent=1 // pred_check_branch
      %38 = sbr.rel (0) target = $region13
    $region12: #{tpu_custom_call.1} parent=1 // pred_region
      _
    $region13: #{tpu_custom_call.1} parent=1 // pred_fallthru
      _
    // Predicated region
    $region14: #{tpu_custom_call.1} parent=1 // pred_check
      _
    $region15: #{tpu_custom_call.1} parent=1 // pred_check_branch
      %40 = sbr.rel (0) target = $region17
    $region16: #{tpu_custom_call.1} parent=1 // pred_region
      %42 = dma.done [#allocation3], 8192
    $region17: #{tpu_custom_call.1} parent=1 // pred_fallthru
      _
    // Predicated region
    $region18: #{tpu_custom_call.1} parent=1 // pred_check
      _
    $region19: #{tpu_custom_call.1} parent=1 // pred_check_branch
      %44 = sbr.rel (0) target = $region21
    $region20: #{tpu_custom_call.1} parent=1 // pred_region
      %46 = dma.done [#allocation6], 1024
    $region21: #{tpu_custom_call.1} parent=1 // pred_fallthru
      _
    %v47 = vld [vmem:[#allocation2] sm:$0xf]
    %v48 = vld [vmem:[#allocation2 + $0x4] sm:$0xf]
    %v49 = vld [vmem:[#allocation2 + $0x8] sm:$0xf]
    %v50 = vld [vmem:[#allocation2 + $0xc] sm:$0xf]
    %v51 = vld [vmem:[#allocation2 + $0x10] sm:$0xf]
    %v52 = vld [vmem:[#allocation2 + $0x14] sm:$0xf]
    %v53 = vld [vmem:[#allocation2 + $0x18] sm:$0xf]
    %v54 = vld [vmem:[#allocation2 + $0x1c] sm:$0xf]
    %v55 = vld [vmem:[#allocation2 + $0x20] sm:$0xf]
    %v56 = vld [vmem:[#allocation2 + $0x24] sm:$0xf]
    %v57 = vld [vmem:[#allocation2 + $0x28] sm:$0xf]
    %v58 = vld [vmem:[#allocation2 + $0x2c] sm:$0xf]
    %v59 = vld [vmem:[#allocation2 + $0x30] sm:$0xf]
    %v60 = vld [vmem:[#allocation2 + $0x34] sm:$0xf]
    %v61 = vld [vmem:[#allocation2 + $0x38] sm:$0xf]
    %v62 = vld [vmem:[#allocation2 + $0x3c] sm:$0xf]
    %v63 = vld [vmem:[#allocation2 + $0x40] sm:$0xf]
    %v64 = vld [vmem:[#allocation2 + $0x44] sm:$0xf]
    %v65 = vld [vmem:[#allocation2 + $0x48] sm:$0xf]
    %v66 = vld [vmem:[#allocation2 + $0x4c] sm:$0xf]
    %v67 = vld [vmem:[#allocation2 + $0x50] sm:$0xf]
    %v68 = vld [vmem:[#allocation2 + $0x54] sm:$0xf]
    %v69 = vld [vmem:[#allocation2 + $0x58] sm:$0xf]
    %v70 = vld [vmem:[#allocation2 + $0x5c] sm:$0xf]
    %v71 = vld [vmem:[#allocation2 + $0x60] sm:$0xf]
    %v72 = vld [vmem:[#allocation2 + $0x64] sm:$0xf]
    %v73 = vld [vmem:[#allocation2 + $0x68] sm:$0xf]
    %v74 = vld [vmem:[#allocation2 + $0x6c] sm:$0xf]
    %v75 = vld [vmem:[#allocation2 + $0x70] sm:$0xf]
    %v76 = vld [vmem:[#allocation2 + $0x74] sm:$0xf]
    %v77 = vld [vmem:[#allocation2 + $0x78] sm:$0xf]
    %v78 = vld [vmem:[#allocation2 + $0x7c] sm:$0xf]
    %v79 = vld [vmem:[#allocation2 + $0x80] sm:$0xf]
    %v80 = vld [vmem:[#allocation2 + $0x84] sm:$0xf]
    %v81 = vld [vmem:[#allocation2 + $0x88] sm:$0xf]
    %v82 = vld [vmem:[#allocation2 + $0x8c] sm:$0xf]
    %v83 = vld [vmem:[#allocation2 + $0x90] sm:$0xf]
    %v84 = vld [vmem:[#allocation2 + $0x94] sm:$0xf]
    %v85 = vld [vmem:[#allocation2 + $0x98] sm:$0xf]
    %v86 = vld [vmem:[#allocation2 + $0x9c] sm:$0xf]
    %v87 = vld [vmem:[#allocation2 + $0xa0] sm:$0xf]
    %v88 = vld [vmem:[#allocation2 + $0xa4] sm:$0xf]
    %v89 = vld [vmem:[#allocation2 + $0xa8] sm:$0xf]
    %v90 = vld [vmem:[#allocation2 + $0xac] sm:$0xf]
    %v91 = vld [vmem:[#allocation2 + $0xb0] sm:$0xf]
    %v92 = vld [vmem:[#allocation2 + $0xb4] sm:$0xf]
    %v93 = vld [vmem:[#allocation2 + $0xb8] sm:$0xf]
    %v94 = vld [vmem:[#allocation2 + $0xbc] sm:$0xf]
    %v95 = vld [vmem:[#allocation2 + $0xc0] sm:$0xf]
    %v96 = vld [vmem:[#allocation2 + $0xc4] sm:$0xf]
    %v97 = vld [vmem:[#allocation2 + $0xc8] sm:$0xf]
    %v98 = vld [vmem:[#allocation2 + $0xcc] sm:$0xf]
    %v99 = vld [vmem:[#allocation2 + $0xd0] sm:$0xf]
    %v100 = vld [vmem:[#allocation2 + $0xd4] sm:$0xf]
    %v101 = vld [vmem:[#allocation2 + $0xd8] sm:$0xf]
    %v102 = vld [vmem:[#allocation2 + $0xdc] sm:$0xf]
    %v103 = vld [vmem:[#allocation2 + $0xe0] sm:$0xf]
    %v104 = vld [vmem:[#allocation2 + $0xe4] sm:$0xf]
    %v105 = vld [vmem:[#allocation2 + $0xe8] sm:$0xf]
    %v106 = vld [vmem:[#allocation2 + $0xec] sm:$0xf]
    %v107 = vld [vmem:[#allocation2 + $0xf0] sm:$0xf]
    %v108 = vld [vmem:[#allocation2 + $0xf4] sm:$0xf]
    %v109 = vld [vmem:[#allocation2 + $0xf8] sm:$0xf]
    %v110 = vld [vmem:[#allocation2 + $0xfc] sm:$0xf]
    %v111 = vld [vmem:[#allocation2 + $0x100] sm:$0xf]
    %v112 = vld [vmem:[#allocation2 + $0x104] sm:$0xf]
    %v113 = vld [vmem:[#allocation2 + $0x108] sm:$0xf]
    %v114 = vld [vmem:[#allocation2 + $0x10c] sm:$0xf]
    %v115 = vld [vmem:[#allocation2 + $0x110] sm:$0xf]
    %v116 = vld [vmem:[#allocation2 + $0x114] sm:$0xf]
    %v117 = vld [vmem:[#allocation2 + $0x118] sm:$0xf]
    %v118 = vld [vmem:[#allocation2 + $0x11c] sm:$0xf]
    %v119 = vld [vmem:[#allocation2 + $0x120] sm:$0xf]
    %v120 = vld [vmem:[#allocation2 + $0x124] sm:$0xf]
    %v121 = vld [vmem:[#allocation2 + $0x128] sm:$0xf]
    %v122 = vld [vmem:[#allocation2 + $0x12c] sm:$0xf]
    %v123 = vld [vmem:[#allocation2 + $0x130] sm:$0xf]
    %v124 = vld [vmem:[#allocation2 + $0x134] sm:$0xf]
    %v125 = vld [vmem:[#allocation2 + $0x138] sm:$0xf]
    %v126 = vld [vmem:[#allocation2 + $0x13c] sm:$0xf]
    %v127 = vld [vmem:[#allocation2 + $0x140] sm:$0xf]
    %v128 = vld [vmem:[#allocation2 + $0x144] sm:$0xf]
    %v129 = vld [vmem:[#allocation2 + $0x148] sm:$0xf]
    %v130 = vld [vmem:[#allocation2 + $0x14c] sm:$0xf]
    %v131 = vld [vmem:[#allocation2 + $0x150] sm:$0xf]
    %v132 = vld [vmem:[#allocation2 + $0x154] sm:$0xf]
    %v133 = vld [vmem:[#allocation2 + $0x158] sm:$0xf]
    %v134 = vld [vmem:[#allocation2 + $0x15c] sm:$0xf]
    %v135 = vld [vmem:[#allocation2 + $0x160] sm:$0xf]
    %v136 = vld [vmem:[#allocation2 + $0x164] sm:$0xf]
    %v137 = vld [vmem:[#allocation2 + $0x168] sm:$0xf]
    %v138 = vld [vmem:[#allocation2 + $0x16c] sm:$0xf]
    %v139 = vld [vmem:[#allocation2 + $0x170] sm:$0xf]
    %v140 = vld [vmem:[#allocation2 + $0x174] sm:$0xf]
    %v141 = vld [vmem:[#allocation2 + $0x178] sm:$0xf]
    %v142 = vld [vmem:[#allocation2 + $0x17c] sm:$0xf]
    %v143 = vld [vmem:[#allocation2 + $0x180] sm:$0xf]
    %v144 = vld [vmem:[#allocation2 + $0x184] sm:$0xf]
    %v145 = vld [vmem:[#allocation2 + $0x188] sm:$0xf]
    %v146 = vld [vmem:[#allocation2 + $0x18c] sm:$0xf]
    %v147 = vld [vmem:[#allocation2 + $0x190] sm:$0xf]
    %v148 = vld [vmem:[#allocation2 + $0x194] sm:$0xf]
    %v149 = vld [vmem:[#allocation2 + $0x198] sm:$0xf]
    %v150 = vld [vmem:[#allocation2 + $0x19c] sm:$0xf]
    %v151 = vld [vmem:[#allocation2 + $0x1a0] sm:$0xf]
    %v152 = vld [vmem:[#allocation2 + $0x1a4] sm:$0xf]
    %v153 = vld [vmem:[#allocation2 + $0x1a8] sm:$0xf]
    %v154 = vld [vmem:[#allocation2 + $0x1ac] sm:$0xf]
    %v155 = vld [vmem:[#allocation2 + $0x1b0] sm:$0xf]
    %v156 = vld [vmem:[#allocation2 + $0x1b4] sm:$0xf]
    %v157 = vld [vmem:[#allocation2 + $0x1b8] sm:$0xf]
    %v158 = vld [vmem:[#allocation2 + $0x1bc] sm:$0xf]
    %v159 = vld [vmem:[#allocation2 + $0x1c0] sm:$0xf]
    %v160 = vld [vmem:[#allocation2 + $0x1c4] sm:$0xf]
    %v161 = vld [vmem:[#allocation2 + $0x1c8] sm:$0xf]
    %v162 = vld [vmem:[#allocation2 + $0x1cc] sm:$0xf]
    %v163 = vld [vmem:[#allocation2 + $0x1d0] sm:$0xf]
    %v164 = vld [vmem:[#allocation2 + $0x1d4] sm:$0xf]
    %v165 = vld [vmem:[#allocation2 + $0x1d8] sm:$0xf]
    %v166 = vld [vmem:[#allocation2 + $0x1dc] sm:$0xf]
    %v167 = vld [vmem:[#allocation2 + $0x1e0] sm:$0xf]
    %v168 = vld [vmem:[#allocation2 + $0x1e4] sm:$0xf]
    %v169 = vld [vmem:[#allocation2 + $0x1e8] sm:$0xf]
    %v170 = vld [vmem:[#allocation2 + $0x1ec] sm:$0xf]
    %v171 = vld [vmem:[#allocation2 + $0x1f0] sm:$0xf]
    %v172 = vld [vmem:[#allocation2 + $0x1f4] sm:$0xf]
    %v173 = vld [vmem:[#allocation2 + $0x1f8] sm:$0xf]
    %v174 = vld [vmem:[#allocation2 + $0x1fc] sm:$0xf]
    %v175 = vld [vmem:[#allocation5] sm:$0xf]
    %v176 = vld [vmem:[#allocation5 + $0x4] sm:$0xf]
    %v177 = vld [vmem:[#allocation5 + $0x8] sm:$0xf]
    %v178 = vld [vmem:[#allocation5 + $0xc] sm:$0xf]
    %v179 = vld [vmem:[#allocation5 + $0x10] sm:$0xf]
    %v180 = vld [vmem:[#allocation5 + $0x14] sm:$0xf]
    %v181 = vld [vmem:[#allocation5 + $0x18] sm:$0xf]
    %v182 = vld [vmem:[#allocation5 + $0x1c] sm:$0xf]
    %v183 = vld [vmem:[#allocation5 + $0x20] sm:$0xf]
    %v184 = vld [vmem:[#allocation5 + $0x24] sm:$0xf]
    %v185 = vld [vmem:[#allocation5 + $0x28] sm:$0xf]
    %v186 = vld [vmem:[#allocation5 + $0x2c] sm:$0xf]
    %v187 = vld [vmem:[#allocation5 + $0x30] sm:$0xf]
    %v188 = vld [vmem:[#allocation5 + $0x34] sm:$0xf]
    %v189 = vld [vmem:[#allocation5 + $0x38] sm:$0xf]
    %v190 = vld [vmem:[#allocation5 + $0x3c] sm:$0xf]
    %v191 = vld [vmem:[%s2] sm:$0x1]
    %v193 = vperm.slane %v191, 0
    %v323 = vunpack.c.l.b16 %v47
    %v324 = vunpack.c.l.b16 %v48
    %v325 = vunpack.c.l.b16 %v49
    %v326 = vunpack.c.l.b16 %v50
    %v327 = vunpack.c.l.b16 %v51
    %v328 = vunpack.c.l.b16 %v52
    %v329 = vunpack.c.l.b16 %v53
    %v330 = vunpack.c.l.b16 %v54
    %v331 = vunpack.c.l.b16 %v55
    %v332 = vunpack.c.l.b16 %v56
    %v333 = vunpack.c.l.b16 %v57
    %v334 = vunpack.c.l.b16 %v58
    %v335 = vunpack.c.l.b16 %v59
    %v336 = vunpack.c.l.b16 %v60
    %v337 = vunpack.c.l.b16 %v61
    %v338 = vunpack.c.l.b16 %v62
    %v339 = vunpack.c.l.b16 %v63
    %v340 = vunpack.c.l.b16 %v64
    %v341 = vunpack.c.l.b16 %v65
    %v342 = vunpack.c.l.b16 %v66
    %v343 = vunpack.c.l.b16 %v67
    %v344 = vunpack.c.l.b16 %v68
    %v345 = vunpack.c.l.b16 %v69
    %v346 = vunpack.c.l.b16 %v70
    %v347 = vunpack.c.l.b16 %v71
    %v348 = vunpack.c.l.b16 %v72
    %v349 = vunpack.c.l.b16 %v73
    %v350 = vunpack.c.l.b16 %v74
    %v351 = vunpack.c.l.b16 %v75
    %v352 = vunpack.c.l.b16 %v76
    %v353 = vunpack.c.l.b16 %v77
    %v354 = vunpack.c.l.b16 %v78
    %v355 = vunpack.c.l.b16 %v79
    %v356 = vunpack.c.l.b16 %v80
    %v357 = vunpack.c.l.b16 %v81
    %v358 = vunpack.c.l.b16 %v82
    %v359 = vunpack.c.l.b16 %v83
    %v360 = vunpack.c.l.b16 %v84
    %v361 = vunpack.c.l.b16 %v85
    %v362 = vunpack.c.l.b16 %v86
    %v363 = vunpack.c.l.b16 %v87
    %v364 = vunpack.c.l.b16 %v88
    %v365 = vunpack.c.l.b16 %v89
    %v366 = vunpack.c.l.b16 %v90
    %v367 = vunpack.c.l.b16 %v91
    %v368 = vunpack.c.l.b16 %v92
    %v369 = vunpack.c.l.b16 %v93
    %v370 = vunpack.c.l.b16 %v94
    %v371 = vunpack.c.l.b16 %v95
    %v372 = vunpack.c.l.b16 %v96
    %v373 = vunpack.c.l.b16 %v97
    %v374 = vunpack.c.l.b16 %v98
    %v375 = vunpack.c.l.b16 %v99
    %v376 = vunpack.c.l.b16 %v100
    %v377 = vunpack.c.l.b16 %v101
    %v378 = vunpack.c.l.b16 %v102
    %v379 = vunpack.c.l.b16 %v103
    %v380 = vunpack.c.l.b16 %v104
    %v381 = vunpack.c.l.b16 %v105
    %v382 = vunpack.c.l.b16 %v106
    %v383 = vunpack.c.l.b16 %v107
    %v384 = vunpack.c.l.b16 %v108
    %v385 = vunpack.c.l.b16 %v109
    %v386 = vunpack.c.l.b16 %v110
    %v387 = vunpack.c.l.b16 %v111
    %v388 = vunpack.c.l.b16 %v112
    %v389 = vunpack.c.l.b16 %v113
    %v390 = vunpack.c.l.b16 %v114
    %v391 = vunpack.c.l.b16 %v115
    %v392 = vunpack.c.l.b16 %v116
    %v393 = vunpack.c.l.b16 %v117
    %v394 = vunpack.c.l.b16 %v118
    %v395 = vunpack.c.l.b16 %v119
    %v396 = vunpack.c.l.b16 %v120
    %v397 = vunpack.c.l.b16 %v121
    %v398 = vunpack.c.l.b16 %v122
    %v399 = vunpack.c.l.b16 %v123
    %v400 = vunpack.c.l.b16 %v124
    %v401 = vunpack.c.l.b16 %v125
    %v402 = vunpack.c.l.b16 %v126
    %v403 = vunpack.c.l.b16 %v127
    %v404 = vunpack.c.l.b16 %v128
    %v405 = vunpack.c.l.b16 %v129
    %v406 = vunpack.c.l.b16 %v130
    %v407 = vunpack.c.l.b16 %v131
    %v408 = vunpack.c.l.b16 %v132
    %v409 = vunpack.c.l.b16 %v133
    %v410 = vunpack.c.l.b16 %v134
    %v411 = vunpack.c.l.b16 %v135
    %v412 = vunpack.c.l.b16 %v136
    %v413 = vunpack.c.l.b16 %v137
    %v414 = vunpack.c.l.b16 %v138
    %v415 = vunpack.c.l.b16 %v139
    %v416 = vunpack.c.l.b16 %v140
    %v417 = vunpack.c.l.b16 %v141
    %v418 = vunpack.c.l.b16 %v142
    %v419 = vunpack.c.l.b16 %v143
    %v420 = vunpack.c.l.b16 %v144
    %v421 = vunpack.c.l.b16 %v145
    %v422 = vunpack.c.l.b16 %v146
    %v423 = vunpack.c.l.b16 %v147
    %v424 = vunpack.c.l.b16 %v148
    %v425 = vunpack.c.l.b16 %v149
    %v426 = vunpack.c.l.b16 %v150
    %v427 = vunpack.c.l.b16 %v151
    %v428 = vunpack.c.l.b16 %v152
    %v429 = vunpack.c.l.b16 %v153
    %v430 = vunpack.c.l.b16 %v154
    %v431 = vunpack.c.l.b16 %v155
    %v432 = vunpack.c.l.b16 %v156
    %v433 = vunpack.c.l.b16 %v157
    %v434 = vunpack.c.l.b16 %v158
    %v435 = vunpack.c.l.b16 %v159
    %v436 = vunpack.c.l.b16 %v160
    %v437 = vunpack.c.l.b16 %v161
    %v438 = vunpack.c.l.b16 %v162
    %v439 = vunpack.c.l.b16 %v163
    %v440 = vunpack.c.l.b16 %v164
    %v441 = vunpack.c.l.b16 %v165
    %v442 = vunpack.c.l.b16 %v166
    %v443 = vunpack.c.l.b16 %v167
    %v444 = vunpack.c.l.b16 %v168
    %v445 = vunpack.c.l.b16 %v169
    %v446 = vunpack.c.l.b16 %v170
    %v447 = vunpack.c.l.b16 %v171
    %v448 = vunpack.c.l.b16 %v172
    %v449 = vunpack.c.l.b16 %v173
    %v450 = vunpack.c.l.b16 %v174
    %v451 = vpack.c.b16 %v324, %v323
    %v452 = vpack.c.b16 %v326, %v325
    %v453 = vpack.c.b16 %v328, %v327
    %v454 = vpack.c.b16 %v330, %v329
    %v455 = vpack.c.b16 %v332, %v331
    %v456 = vpack.c.b16 %v334, %v333
    %v457 = vpack.c.b16 %v336, %v335
    %v458 = vpack.c.b16 %v338, %v337
    %v459 = vpack.c.b16 %v340, %v339
    %v460 = vpack.c.b16 %v342, %v341
    %v461 = vpack.c.b16 %v344, %v343
    %v462 = vpack.c.b16 %v346, %v345
    %v463 = vpack.c.b16 %v348, %v347
    %v464 = vpack.c.b16 %v350, %v349
    %v465 = vpack.c.b16 %v352, %v351
    %v466 = vpack.c.b16 %v354, %v353
    %v467 = vpack.c.b16 %v356, %v355
    %v468 = vpack.c.b16 %v358, %v357
    %v469 = vpack.c.b16 %v360, %v359
    %v470 = vpack.c.b16 %v362, %v361
    %v471 = vpack.c.b16 %v364, %v363
    %v472 = vpack.c.b16 %v366, %v365
    %v473 = vpack.c.b16 %v368, %v367
    %v474 = vpack.c.b16 %v370, %v369
    %v475 = vpack.c.b16 %v372, %v371
    %v476 = vpack.c.b16 %v374, %v373
    %v477 = vpack.c.b16 %v376, %v375
    %v478 = vpack.c.b16 %v378, %v377
    %v479 = vpack.c.b16 %v380, %v379
    %v480 = vpack.c.b16 %v382, %v381
    %v481 = vpack.c.b16 %v384, %v383
    %v482 = vpack.c.b16 %v386, %v385
    %v483 = vpack.c.b16 %v388, %v387
    %v484 = vpack.c.b16 %v390, %v389
    %v485 = vpack.c.b16 %v392, %v391
    %v486 = vpack.c.b16 %v394, %v393
    %v487 = vpack.c.b16 %v396, %v395
    %v488 = vpack.c.b16 %v398, %v397
    %v489 = vpack.c.b16 %v400, %v399
    %v490 = vpack.c.b16 %v402, %v401
    %v491 = vpack.c.b16 %v404, %v403
    %v492 = vpack.c.b16 %v406, %v405
    %v493 = vpack.c.b16 %v408, %v407
    %v494 = vpack.c.b16 %v410, %v409
    %v495 = vpack.c.b16 %v412, %v411
    %v496 = vpack.c.b16 %v414, %v413
    %v497 = vpack.c.b16 %v416, %v415
    %v498 = vpack.c.b16 %v418, %v417
    %v499 = vpack.c.b16 %v420, %v419
    %v500 = vpack.c.b16 %v422, %v421
    %v501 = vpack.c.b16 %v424, %v423
    %v502 = vpack.c.b16 %v426, %v425
    %v503 = vpack.c.b16 %v428, %v427
    %v504 = vpack.c.b16 %v430, %v429
    %v505 = vpack.c.b16 %v432, %v431
    %v506 = vpack.c.b16 %v434, %v433
    %v507 = vpack.c.b16 %v436, %v435
    %v508 = vpack.c.b16 %v438, %v437
    %v509 = vpack.c.b16 %v440, %v439
    %v510 = vpack.c.b16 %v442, %v441
    %v511 = vpack.c.b16 %v444, %v443
    %v512 = vpack.c.b16 %v446, %v445
    %v513 = vpack.c.b16 %v448, %v447
    %v514 = vpack.c.b16 %v450, %v449
    %v595 = vunpack.c.l.b16 %v175
    %v596 = vunpack.c.l.b16 %v176
    %v597 = vunpack.c.l.b16 %v177
    %v598 = vunpack.c.l.b16 %v178
    %v599 = vunpack.c.l.b16 %v179
    %v600 = vunpack.c.l.b16 %v180
    %v601 = vunpack.c.l.b16 %v181
    %v602 = vunpack.c.l.b16 %v182
    %v603 = vunpack.c.l.b16 %v183
    %v604 = vunpack.c.l.b16 %v184
    %v605 = vunpack.c.l.b16 %v185
    %v606 = vunpack.c.l.b16 %v186
    %v607 = vunpack.c.l.b16 %v187
    %v608 = vunpack.c.l.b16 %v188
    %v609 = vunpack.c.l.b16 %v189
    %v610 = vunpack.c.l.b16 %v190
    %v611 = vpack.c.b16 %v596, %v595
    %v612 = vpack.c.b16 %v598, %v597
    %v613 = vpack.c.b16 %v600, %v599
    %v614 = vpack.c.b16 %v602, %v601
    %v615 = vpack.c.b16 %v604, %v603
    %v616 = vpack.c.b16 %v606, %v605
    %v617 = vpack.c.b16 %v608, %v607
    %v618 = vpack.c.b16 %v610, %v609
    %627 = vmatpush.bf16.msra.mxu0 %v618
    %628 = vmatpush.bf16.msra.mxu0 %v617
    %629 = vmatpush.bf16.msra.mxu0 %v616
    %630 = vmatpush.bf16.msra.mxu0 %v615
    %631 = vmatpush.bf16.msra.mxu0 %v614
    %632 = vmatpush.bf16.msra.mxu0 %v613
    %633 = vmatpush.bf16.msra.mxu0 %v612
    %634 = vmatpush.bf16.msra.mxu0 %v611
    %635 = vmatmul.bf16.gmra.mxu0 %v451
    %v636 = vpop.f32.mrf.mxu0
    %v637 = vadd.f32 %v193, %v636
    %v638 = vpop.f32.mrf.mxu0
    %v639 = vadd.f32 %v193, %v638
    %640 = vmatmul.bf16.gmra.mxu0 %v452
    %v641 = vpop.f32.mrf.mxu0
    %v642 = vadd.f32 %v193, %v641
    %v643 = vpop.f32.mrf.mxu0
    %v644 = vadd.f32 %v193, %v643
    %645 = vmatmul.bf16.gmra.mxu0 %v453
    %v646 = vpop.f32.mrf.mxu0
    %v647 = vadd.f32 %v193, %v646
    %v648 = vpop.f32.mrf.mxu0
    %v649 = vadd.f32 %v193, %v648
    %650 = vmatmul.bf16.gmra.mxu0 %v454
    %v651 = vpop.f32.mrf.mxu0
    %v652 = vadd.f32 %v193, %v651
    %v653 = vpop.f32.mrf.mxu0
    %v654 = vadd.f32 %v193, %v653
    %655 = vmatmul.bf16.gmra.mxu0 %v455
    %v656 = vpop.f32.mrf.mxu0
    %v657 = vadd.f32 %v193, %v656
    %v658 = vpop.f32.mrf.mxu0
    %v659 = vadd.f32 %v193, %v658
    %660 = vmatmul.bf16.gmra.mxu0 %v456
    %v661 = vpop.f32.mrf.mxu0
    %v662 = vadd.f32 %v193, %v661
    %v663 = vpop.f32.mrf.mxu0
    %v664 = vadd.f32 %v193, %v663
    %665 = vmatmul.bf16.gmra.mxu0 %v457
    %v666 = vpop.f32.mrf.mxu0
    %v667 = vadd.f32 %v193, %v666
    %v668 = vpop.f32.mrf.mxu0
    %v669 = vadd.f32 %v193, %v668
    %670 = vmatmul.bf16.gmra.mxu0 %v458
    %v671 = vpop.f32.mrf.mxu0
    %v672 = vadd.f32 %v193, %v671
    %v673 = vpop.f32.mrf.mxu0
    %v674 = vadd.f32 %v193, %v673
    %675 = vmatmul.bf16.gmra.mxu0 %v459
    %v676 = vpop.f32.mrf.mxu0
    %v677 = vadd.f32 %v193, %v676
    %v678 = vpop.f32.mrf.mxu0
    %v679 = vadd.f32 %v193, %v678
    %680 = vmatmul.bf16.gmra.mxu0 %v460
    %v681 = vpop.f32.mrf.mxu0
    %v682 = vadd.f32 %v193, %v681
    %v683 = vpop.f32.mrf.mxu0
    %v684 = vadd.f32 %v193, %v683
    %685 = vmatmul.bf16.gmra.mxu0 %v461
    %v686 = vpop.f32.mrf.mxu0
    %v687 = vadd.f32 %v193, %v686
    %v688 = vpop.f32.mrf.mxu0
    %v689 = vadd.f32 %v193, %v688
    %690 = vmatmul.bf16.gmra.mxu0 %v462
    %v691 = vpop.f32.mrf.mxu0
    %v692 = vadd.f32 %v193, %v691
    %v693 = vpop.f32.mrf.mxu0
    %v694 = vadd.f32 %v193, %v693
    %695 = vmatmul.bf16.gmra.mxu0 %v463
    %v696 = vpop.f32.mrf.mxu0
    %v697 = vadd.f32 %v193, %v696
    %v698 = vpop.f32.mrf.mxu0
    %v699 = vadd.f32 %v193, %v698
    %700 = vmatmul.bf16.gmra.mxu0 %v464
    %v701 = vpop.f32.mrf.mxu0
    %v702 = vadd.f32 %v193, %v701
    %v703 = vpop.f32.mrf.mxu0
    %v704 = vadd.f32 %v193, %v703
    %705 = vmatmul.bf16.gmra.mxu0 %v465
    %v706 = vpop.f32.mrf.mxu0
    %v707 = vadd.f32 %v193, %v706
    %v708 = vpop.f32.mrf.mxu0
    %v709 = vadd.f32 %v193, %v708
    %710 = vmatmul.bf16.gmra.mxu0 %v466
    %v711 = vpop.f32.mrf.mxu0
    %v712 = vadd.f32 %v193, %v711
    %v713 = vpop.f32.mrf.mxu0
    %v714 = vadd.f32 %v193, %v713
    %715 = vmatmul.bf16.gmra.mxu0 %v467
    %v716 = vpop.f32.mrf.mxu0
    %v717 = vadd.f32 %v193, %v716
    %v718 = vpop.f32.mrf.mxu0
    %v719 = vadd.f32 %v193, %v718
    %720 = vmatmul.bf16.gmra.mxu0 %v468
    %v721 = vpop.f32.mrf.mxu0
    %v722 = vadd.f32 %v193, %v721
    %v723 = vpop.f32.mrf.mxu0
    %v724 = vadd.f32 %v193, %v723
    %725 = vmatmul.bf16.gmra.mxu0 %v469
    %v726 = vpop.f32.mrf.mxu0
    %v727 = vadd.f32 %v193, %v726
    %v728 = vpop.f32.mrf.mxu0
    %v729 = vadd.f32 %v193, %v728
    %730 = vmatmul.bf16.gmra.mxu0 %v470
    %v731 = vpop.f32.mrf.mxu0
    %v732 = vadd.f32 %v193, %v731
    %v733 = vpop.f32.mrf.mxu0
    %v734 = vadd.f32 %v193, %v733
    %735 = vmatmul.bf16.gmra.mxu0 %v471
    %v736 = vpop.f32.mrf.mxu0
    %v737 = vadd.f32 %v193, %v736
    %v738 = vpop.f32.mrf.mxu0
    %v739 = vadd.f32 %v193, %v738
    %740 = vmatmul.bf16.gmra.mxu0 %v472
    %v741 = vpop.f32.mrf.mxu0
    %v742 = vadd.f32 %v193, %v741
    %v743 = vpop.f32.mrf.mxu0
    %v744 = vadd.f32 %v193, %v743
    %745 = vmatmul.bf16.gmra.mxu0 %v473
    %v746 = vpop.f32.mrf.mxu0
    %v747 = vadd.f32 %v193, %v746
    %v748 = vpop.f32.mrf.mxu0
    %v749 = vadd.f32 %v193, %v748
    %750 = vmatmul.bf16.gmra.mxu0 %v474
    %v751 = vpop.f32.mrf.mxu0
    %v752 = vadd.f32 %v193, %v751
    %v753 = vpop.f32.mrf.mxu0
    %v754 = vadd.f32 %v193, %v753
    %755 = vmatmul.bf16.gmra.mxu0 %v475
    %v756 = vpop.f32.mrf.mxu0
    %v757 = vadd.f32 %v193, %v756
    %v758 = vpop.f32.mrf.mxu0
    %v759 = vadd.f32 %v193, %v758
    %760 = vmatmul.bf16.gmra.mxu0 %v476
    %v761 = vpop.f32.mrf.mxu0
    %v762 = vadd.f32 %v193, %v761
    %v763 = vpop.f32.mrf.mxu0
    %v764 = vadd.f32 %v193, %v763
    %765 = vmatmul.bf16.gmra.mxu0 %v477
    %v766 = vpop.f32.mrf.mxu0
    %v767 = vadd.f32 %v193, %v766
    %v768 = vpop.f32.mrf.mxu0
    %v769 = vadd.f32 %v193, %v768
    %770 = vmatmul.bf16.gmra.mxu0 %v478
    %v771 = vpop.f32.mrf.mxu0
    %v772 = vadd.f32 %v193, %v771
    %v773 = vpop.f32.mrf.mxu0
    %v774 = vadd.f32 %v193, %v773
    %775 = vmatmul.bf16.gmra.mxu0 %v479
    %v776 = vpop.f32.mrf.mxu0
    %v777 = vadd.f32 %v193, %v776
    %v778 = vpop.f32.mrf.mxu0
    %v779 = vadd.f32 %v193, %v778
    %780 = vmatmul.bf16.gmra.mxu0 %v480
    %v781 = vpop.f32.mrf.mxu0
    %v782 = vadd.f32 %v193, %v781
    %v783 = vpop.f32.mrf.mxu0
    %v784 = vadd.f32 %v193, %v783
    %785 = vmatmul.bf16.gmra.mxu0 %v481
    %v786 = vpop.f32.mrf.mxu0
    %v787 = vadd.f32 %v193, %v786
    %v788 = vpop.f32.mrf.mxu0
    %v789 = vadd.f32 %v193, %v788
    %790 = vmatmul.bf16.gmra.mxu0 %v482
    %v791 = vpop.f32.mrf.mxu0
    %v792 = vadd.f32 %v193, %v791
    %v793 = vpop.f32.mrf.mxu0
    %v794 = vadd.f32 %v193, %v793
    %795 = vmatmul.bf16.gmra.mxu0 %v483
    %v796 = vpop.f32.mrf.mxu0
    %v797 = vadd.f32 %v193, %v796
    %v798 = vpop.f32.mrf.mxu0
    %v799 = vadd.f32 %v193, %v798
    %800 = vmatmul.bf16.gmra.mxu0 %v484
    %v801 = vpop.f32.mrf.mxu0
    %v802 = vadd.f32 %v193, %v801
    %v803 = vpop.f32.mrf.mxu0
    %v804 = vadd.f32 %v193, %v803
    %805 = vmatmul.bf16.gmra.mxu0 %v485
    %v806 = vpop.f32.mrf.mxu0
    %v807 = vadd.f32 %v193, %v806
    %v808 = vpop.f32.mrf.mxu0
    %v809 = vadd.f32 %v193, %v808
    %810 = vmatmul.bf16.gmra.mxu0 %v486
    %v811 = vpop.f32.mrf.mxu0
    %v812 = vadd.f32 %v193, %v811
    %v813 = vpop.f32.mrf.mxu0
    %v814 = vadd.f32 %v193, %v813
    %815 = vmatmul.bf16.gmra.mxu0 %v487
    %v816 = vpop.f32.mrf.mxu0
    %v817 = vadd.f32 %v193, %v816
    %v818 = vpop.f32.mrf.mxu0
    %v819 = vadd.f32 %v193, %v818
    %820 = vmatmul.bf16.gmra.mxu0 %v488
    %v821 = vpop.f32.mrf.mxu0
    %v822 = vadd.f32 %v193, %v821
    %v823 = vpop.f32.mrf.mxu0
    %v824 = vadd.f32 %v193, %v823
    %825 = vmatmul.bf16.gmra.mxu0 %v489
    %v826 = vpop.f32.mrf.mxu0
    %v827 = vadd.f32 %v193, %v826
    %v828 = vpop.f32.mrf.mxu0
    %v829 = vadd.f32 %v193, %v828
    %830 = vmatmul.bf16.gmra.mxu0 %v490
    %v831 = vpop.f32.mrf.mxu0
    %v832 = vadd.f32 %v193, %v831
    %v833 = vpop.f32.mrf.mxu0
    %v834 = vadd.f32 %v193, %v833
    %835 = vmatmul.bf16.gmra.mxu0 %v491
    %v836 = vpop.f32.mrf.mxu0
    %v837 = vadd.f32 %v193, %v836
    %v838 = vpop.f32.mrf.mxu0
    %v839 = vadd.f32 %v193, %v838
    %840 = vmatmul.bf16.gmra.mxu0 %v492
    %v841 = vpop.f32.mrf.mxu0
    %v842 = vadd.f32 %v193, %v841
    %v843 = vpop.f32.mrf.mxu0
    %v844 = vadd.f32 %v193, %v843
    %845 = vmatmul.bf16.gmra.mxu0 %v493
    %v846 = vpop.f32.mrf.mxu0
    %v847 = vadd.f32 %v193, %v846
    %v848 = vpop.f32.mrf.mxu0
    %v849 = vadd.f32 %v193, %v848
    %850 = vmatmul.bf16.gmra.mxu0 %v494
    %v851 = vpop.f32.mrf.mxu0
    %v852 = vadd.f32 %v193, %v851
    %v853 = vpop.f32.mrf.mxu0
    %v854 = vadd.f32 %v193, %v853
    %855 = vmatmul.bf16.gmra.mxu0 %v495
    %v856 = vpop.f32.mrf.mxu0
    %v857 = vadd.f32 %v193, %v856
    %v858 = vpop.f32.mrf.mxu0
    %v859 = vadd.f32 %v193, %v858
    %860 = vmatmul.bf16.gmra.mxu0 %v496
    %v861 = vpop.f32.mrf.mxu0
    %v862 = vadd.f32 %v193, %v861
    %v863 = vpop.f32.mrf.mxu0
    %v864 = vadd.f32 %v193, %v863
    %865 = vmatmul.bf16.gmra.mxu0 %v497
    %v866 = vpop.f32.mrf.mxu0
    %v867 = vadd.f32 %v193, %v866
    %v868 = vpop.f32.mrf.mxu0
    %v869 = vadd.f32 %v193, %v868
    %870 = vmatmul.bf16.gmra.mxu0 %v498
    %v871 = vpop.f32.mrf.mxu0
    %v872 = vadd.f32 %v193, %v871
    %v873 = vpop.f32.mrf.mxu0
    %v874 = vadd.f32 %v193, %v873
    %875 = vmatmul.bf16.gmra.mxu0 %v499
    %v876 = vpop.f32.mrf.mxu0
    %v877 = vadd.f32 %v193, %v876
    %v878 = vpop.f32.mrf.mxu0
    %v879 = vadd.f32 %v193, %v878
    %880 = vmatmul.bf16.gmra.mxu0 %v500
    %v881 = vpop.f32.mrf.mxu0
    %v882 = vadd.f32 %v193, %v881
    %v883 = vpop.f32.mrf.mxu0
    %v884 = vadd.f32 %v193, %v883
    %885 = vmatmul.bf16.gmra.mxu0 %v501
    %v886 = vpop.f32.mrf.mxu0
    %v887 = vadd.f32 %v193, %v886
    %v888 = vpop.f32.mrf.mxu0
    %v889 = vadd.f32 %v193, %v888
    %890 = vmatmul.bf16.gmra.mxu0 %v502
    %v891 = vpop.f32.mrf.mxu0
    %v892 = vadd.f32 %v193, %v891
    %v893 = vpop.f32.mrf.mxu0
    %v894 = vadd.f32 %v193, %v893
    %895 = vmatmul.bf16.gmra.mxu0 %v503
    %v896 = vpop.f32.mrf.mxu0
    %v897 = vadd.f32 %v193, %v896
    %v898 = vpop.f32.mrf.mxu0
    %v899 = vadd.f32 %v193, %v898
    %900 = vmatmul.bf16.gmra.mxu0 %v504
    %v901 = vpop.f32.mrf.mxu0
    %v902 = vadd.f32 %v193, %v901
    %v903 = vpop.f32.mrf.mxu0
    %v904 = vadd.f32 %v193, %v903
    %905 = vmatmul.bf16.gmra.mxu0 %v505
    %v906 = vpop.f32.mrf.mxu0
    %v907 = vadd.f32 %v193, %v906
    %v908 = vpop.f32.mrf.mxu0
    %v909 = vadd.f32 %v193, %v908
    %910 = vmatmul.bf16.gmra.mxu0 %v506
    %v911 = vpop.f32.mrf.mxu0
    %v912 = vadd.f32 %v193, %v911
    %v913 = vpop.f32.mrf.mxu0
    %v914 = vadd.f32 %v193, %v913
    %915 = vmatmul.bf16.gmra.mxu0 %v507
    %v916 = vpop.f32.mrf.mxu0
    %v917 = vadd.f32 %v193, %v916
    %v918 = vpop.f32.mrf.mxu0
    %v919 = vadd.f32 %v193, %v918
    %920 = vmatmul.bf16.gmra.mxu0 %v508
    %v921 = vpop.f32.mrf.mxu0
    %v922 = vadd.f32 %v193, %v921
    %v923 = vpop.f32.mrf.mxu0
    %v924 = vadd.f32 %v193, %v923
    %925 = vmatmul.bf16.gmra.mxu0 %v509
    %v926 = vpop.f32.mrf.mxu0
    %v927 = vadd.f32 %v193, %v926
    %v928 = vpop.f32.mrf.mxu0
    %v929 = vadd.f32 %v193, %v928
    %930 = vmatmul.bf16.gmra.mxu0 %v510
    %v931 = vpop.f32.mrf.mxu0
    %v932 = vadd.f32 %v193, %v931
    %v933 = vpop.f32.mrf.mxu0
    %v934 = vadd.f32 %v193, %v933
    %935 = vmatmul.bf16.gmra.mxu0 %v511
    %v936 = vpop.f32.mrf.mxu0
    %v937 = vadd.f32 %v193, %v936
    %v938 = vpop.f32.mrf.mxu0
    %v939 = vadd.f32 %v193, %v938
    %940 = vmatmul.bf16.gmra.mxu0 %v512
    %v941 = vpop.f32.mrf.mxu0
    %v942 = vadd.f32 %v193, %v941
    %v943 = vpop.f32.mrf.mxu0
    %v944 = vadd.f32 %v193, %v943
    %945 = vmatmul.bf16.gmra.mxu0 %v513
    %v946 = vpop.f32.mrf.mxu0
    %v947 = vadd.f32 %v193, %v946
    %v948 = vpop.f32.mrf.mxu0
    %v949 = vadd.f32 %v193, %v948
    %950 = vmatmul.bf16.gmra.mxu0 %v514
    %v951 = vpop.f32.mrf.mxu0
    %v952 = vadd.f32 %v193, %v951
    %v953 = vpop.f32.mrf.mxu0
    %v954 = vadd.f32 %v193, %v953
    %955 = vdwg.mxu0
    %956 = vst [vmem:[#allocation7] sm:$0xff] %v637
    %957 = vst [vmem:[#allocation7 + $0x8] sm:$0xff] %v639
    %958 = vst [vmem:[#allocation7 + $0x10] sm:$0xff] %v642
    %959 = vst [vmem:[#allocation7 + $0x18] sm:$0xff] %v644
    %960 = vst [vmem:[#allocation7 + $0x20] sm:$0xff] %v647
    %961 = vst [vmem:[#allocation7 + $0x28] sm:$0xff] %v649
    %962 = vst [vmem:[#allocation7 + $0x30] sm:$0xff] %v652
    %963 = vst [vmem:[#allocation7 + $0x38] sm:$0xff] %v654
    %964 = vst [vmem:[#allocation7 + $0x40] sm:$0xff] %v657
    %965 = vst [vmem:[#allocation7 + $0x48] sm:$0xff] %v659
    %966 = vst [vmem:[#allocation7 + $0x50] sm:$0xff] %v662
    %967 = vst [vmem:[#allocation7 + $0x58] sm:$0xff] %v664
    %968 = vst [vmem:[#allocation7 + $0x60] sm:$0xff] %v667
    %969 = vst [vmem:[#allocation7 + $0x68] sm:$0xff] %v669
    %970 = vst [vmem:[#allocation7 + $0x70] sm:$0xff] %v672
    %971 = vst [vmem:[#allocation7 + $0x78] sm:$0xff] %v674
    %972 = vst [vmem:[#allocation7 + $0x80] sm:$0xff] %v677
    %973 = vst [vmem:[#allocation7 + $0x88] sm:$0xff] %v679
    %974 = vst [vmem:[#allocation7 + $0x90] sm:$0xff] %v682
    %975 = vst [vmem:[#allocation7 + $0x98] sm:$0xff] %v684
    %976 = vst [vmem:[#allocation7 + $0xa0] sm:$0xff] %v687
    %977 = vst [vmem:[#allocation7 + $0xa8] sm:$0xff] %v689
    %978 = vst [vmem:[#allocation7 + $0xb0] sm:$0xff] %v692
    %979 = vst [vmem:[#allocation7 + $0xb8] sm:$0xff] %v694
    %980 = vst [vmem:[#allocation7 + $0xc0] sm:$0xff] %v697
    %981 = vst [vmem:[#allocation7 + $0xc8] sm:$0xff] %v699
    %982 = vst [vmem:[#allocation7 + $0xd0] sm:$0xff] %v702
    %983 = vst [vmem:[#allocation7 + $0xd8] sm:$0xff] %v704
    %984 = vst [vmem:[#allocation7 + $0xe0] sm:$0xff] %v707
    %985 = vst [vmem:[#allocation7 + $0xe8] sm:$0xff] %v709
    %986 = vst [vmem:[#allocation7 + $0xf0] sm:$0xff] %v712
    %987 = vst [vmem:[#allocation7 + $0xf8] sm:$0xff] %v714
    %988 = vst [vmem:[#allocation7 + $0x100] sm:$0xff] %v717
    %989 = vst [vmem:[#allocation7 + $0x108] sm:$0xff] %v719
    %990 = vst [vmem:[#allocation7 + $0x110] sm:$0xff] %v722
    %991 = vst [vmem:[#allocation7 + $0x118] sm:$0xff] %v724
    %992 = vst [vmem:[#allocation7 + $0x120] sm:$0xff] %v727
    %993 = vst [vmem:[#allocation7 + $0x128] sm:$0xff] %v729
    %994 = vst [vmem:[#allocation7 + $0x130] sm:$0xff] %v732
    %995 = vst [vmem:[#allocation7 + $0x138] sm:$0xff] %v734
    %996 = vst [vmem:[#allocation7 + $0x140] sm:$0xff] %v737
    %997 = vst [vmem:[#allocation7 + $0x148] sm:$0xff] %v739
    %998 = vst [vmem:[#allocation7 + $0x150] sm:$0xff] %v742
    %999 = vst [vmem:[#allocation7 + $0x158] sm:$0xff] %v744
    %1000 = vst [vmem:[#allocation7 + $0x160] sm:$0xff] %v747
    %1001 = vst [vmem:[#allocation7 + $0x168] sm:$0xff] %v749
    %1002 = vst [vmem:[#allocation7 + $0x170] sm:$0xff] %v752
    %1003 = vst [vmem:[#allocation7 + $0x178] sm:$0xff] %v754
    %1004 = vst [vmem:[#allocation7 + $0x180] sm:$0xff] %v757
    %1005 = vst [vmem:[#allocation7 + $0x188] sm:$0xff] %v759
    %1006 = vst [vmem:[#allocation7 + $0x190] sm:$0xff] %v762
    %1007 = vst [vmem:[#allocation7 + $0x198] sm:$0xff] %v764
    %1008 = vst [vmem:[#allocation7 + $0x1a0] sm:$0xff] %v767
    %1009 = vst [vmem:[#allocation7 + $0x1a8] sm:$0xff] %v769
    %1010 = vst [vmem:[#allocation7 + $0x1b0] sm:$0xff] %v772
    %1011 = vst [vmem:[#allocation7 + $0x1b8] sm:$0xff] %v774
    %1012 = vst [vmem:[#allocation7 + $0x1c0] sm:$0xff] %v777
    %1013 = vst [vmem:[#allocation7 + $0x1c8] sm:$0xff] %v779
    %1014 = vst [vmem:[#allocation7 + $0x1d0] sm:$0xff] %v782
    %1015 = vst [vmem:[#allocation7 + $0x1d8] sm:$0xff] %v784
    %1016 = vst [vmem:[#allocation7 + $0x1e0] sm:$0xff] %v787
    %1017 = vst [vmem:[#allocation7 + $0x1e8] sm:$0xff] %v789
    %1018 = vst [vmem:[#allocation7 + $0x1f0] sm:$0xff] %v792
    %1019 = vst [vmem:[#allocation7 + $0x1f8] sm:$0xff] %v794
    %1020 = vst [vmem:[#allocation7 + $0x200] sm:$0xff] %v797
    %1021 = vst [vmem:[#allocation7 + $0x208] sm:$0xff] %v799
    %1022 = vst [vmem:[#allocation7 + $0x210] sm:$0xff] %v802
    %1023 = vst [vmem:[#allocation7 + $0x218] sm:$0xff] %v804
    %1024 = vst [vmem:[#allocation7 + $0x220] sm:$0xff] %v807
    %1025 = vst [vmem:[#allocation7 + $0x228] sm:$0xff] %v809
    %1026 = vst [vmem:[#allocation7 + $0x230] sm:$0xff] %v812
    %1027 = vst [vmem:[#allocation7 + $0x238] sm:$0xff] %v814
    %1028 = vst [vmem:[#allocation7 + $0x240] sm:$0xff] %v817
    %1029 = vst [vmem:[#allocation7 + $0x248] sm:$0xff] %v819
    %1030 = vst [vmem:[#allocation7 + $0x250] sm:$0xff] %v822
    %1031 = vst [vmem:[#allocation7 + $0x258] sm:$0xff] %v824
    %1032 = vst [vmem:[#allocation7 + $0x260] sm:$0xff] %v827
    %1033 = vst [vmem:[#allocation7 + $0x268] sm:$0xff] %v829
    %1034 = vst [vmem:[#allocation7 + $0x270] sm:$0xff] %v832
    %1035 = vst [vmem:[#allocation7 + $0x278] sm:$0xff] %v834
    %1036 = vst [vmem:[#allocation7 + $0x280] sm:$0xff] %v837
    %1037 = vst [vmem:[#allocation7 + $0x288] sm:$0xff] %v839
    %1038 = vst [vmem:[#allocation7 + $0x290] sm:$0xff] %v842
    %1039 = vst [vmem:[#allocation7 + $0x298] sm:$0xff] %v844
    %1040 = vst [vmem:[#allocation7 + $0x2a0] sm:$0xff] %v847
    %1041 = vst [vmem:[#allocation7 + $0x2a8] sm:$0xff] %v849
    %1042 = vst [vmem:[#allocation7 + $0x2b0] sm:$0xff] %v852
    %1043 = vst [vmem:[#allocation7 + $0x2b8] sm:$0xff] %v854
    %1044 = vst [vmem:[#allocation7 + $0x2c0] sm:$0xff] %v857
    %1045 = vst [vmem:[#allocation7 + $0x2c8] sm:$0xff] %v859
    %1046 = vst [vmem:[#allocation7 + $0x2d0] sm:$0xff] %v862
    %1047 = vst [vmem:[#allocation7 + $0x2d8] sm:$0xff] %v864
    %1048 = vst [vmem:[#allocation7 + $0x2e0] sm:$0xff] %v867
    %1049 = vst [vmem:[#allocation7 + $0x2e8] sm:$0xff] %v869
    %1050 = vst [vmem:[#allocation7 + $0x2f0] sm:$0xff] %v872
    %1051 = vst [vmem:[#allocation7 + $0x2f8] sm:$0xff] %v874
    %1052 = vst [vmem:[#allocation7 + $0x300] sm:$0xff] %v877
    %1053 = vst [vmem:[#allocation7 + $0x308] sm:$0xff] %v879
    %1054 = vst [vmem:[#allocation7 + $0x310] sm:$0xff] %v882
    %1055 = vst [vmem:[#allocation7 + $0x318] sm:$0xff] %v884
    %1056 = vst [vmem:[#allocation7 + $0x320] sm:$0xff] %v887
    %1057 = vst [vmem:[#allocation7 + $0x328] sm:$0xff] %v889
    %1058 = vst [vmem:[#allocation7 + $0x330] sm:$0xff] %v892
    %1059 = vst [vmem:[#allocation7 + $0x338] sm:$0xff] %v894
    %1060 = vst [vmem:[#allocation7 + $0x340] sm:$0xff] %v897
    %1061 = vst [vmem:[#allocation7 + $0x348] sm:$0xff] %v899
    %1062 = vst [vmem:[#allocation7 + $0x350] sm:$0xff] %v902
    %1063 = vst [vmem:[#allocation7 + $0x358] sm:$0xff] %v904
    %1064 = vst [vmem:[#allocation7 + $0x360] sm:$0xff] %v907
    %1065 = vst [vmem:[#allocation7 + $0x368] sm:$0xff] %v909
    %1066 = vst [vmem:[#allocation7 + $0x370] sm:$0xff] %v912
    %1067 = vst [vmem:[#allocation7 + $0x378] sm:$0xff] %v914
    %1068 = vst [vmem:[#allocation7 + $0x380] sm:$0xff] %v917
    %1069 = vst [vmem:[#allocation7 + $0x388] sm:$0xff] %v919
    %1070 = vst [vmem:[#allocation7 + $0x390] sm:$0xff] %v922
    %1071 = vst [vmem:[#allocation7 + $0x398] sm:$0xff] %v924
    %1072 = vst [vmem:[#allocation7 + $0x3a0] sm:$0xff] %v927
    %1073 = vst [vmem:[#allocation7 + $0x3a8] sm:$0xff] %v929
    %1074 = vst [vmem:[#allocation7 + $0x3b0] sm:$0xff] %v932
    %1075 = vst [vmem:[#allocation7 + $0x3b8] sm:$0xff] %v934
    %1076 = vst [vmem:[#allocation7 + $0x3c0] sm:$0xff] %v937
    %1077 = vst [vmem:[#allocation7 + $0x3c8] sm:$0xff] %v939
    %1078 = vst [vmem:[#allocation7 + $0x3d0] sm:$0xff] %v942
    %1079 = vst [vmem:[#allocation7 + $0x3d8] sm:$0xff] %v944
    %1080 = vst [vmem:[#allocation7 + $0x3e0] sm:$0xff] %v947
    %1081 = vst [vmem:[#allocation7 + $0x3e8] sm:$0xff] %v949
    %1082 = vst [vmem:[#allocation7 + $0x3f0] sm:$0xff] %v952
    %1083 = vst [vmem:[#allocation7 + $0x3f8] sm:$0xff] %v954
    // Predicated region
    $region22: #{tpu_custom_call.1} parent=1 // pred_check
      _
    $region23: #{tpu_custom_call.1} parent=1 // pred_check_branch
      %1085 = sbr.rel (0) target = $region25
    $region24: #{tpu_custom_call.1} parent=1 // pred_region
      %1087 = vsyncadd [#allocation4], 0
      %s1088 = sshll.u32 [#allocation7], 4
      %s1089 = int_to_ptr.vmem [resolvable:$true] %s1088
      %s1090 = sshll.u32 %s3, 4
      %s1091 = int_to_ptr.hbm [resolvable:$true] %s1090
      %1096 = dma.vmem_to_hbm [thread:$0]  %s1089, 16384, %s1091, [#allocation4], 128, 128, 8
    $region25: #{tpu_custom_call.1} parent=1 // pred_fallthru
      _
    // Predicated region
    $region26: #{tpu_custom_call.1} parent=1 // pred_check
      _
    $region27: #{tpu_custom_call.1} parent=1 // pred_check_branch
      %1098 = sbr.rel (0) target = $region29
    $region28: #{tpu_custom_call.1} parent=1 // pred_region
      %1100 = dma.done [#allocation4], 16384
    $region29: #{tpu_custom_call.1} parent=1 // pred_fallthru
      _
    %1101 = vsyncpa [#allocation3], 1
    %1102 = vsyncpa [#allocation6], 1
    %1103 = vsyncpa [#allocation4], 1

</llo_original>
